<compile_context>
chip_gen: v5e
topology: v5e:2x2
jax: 0.10.0
libtpu: 0.0.40
codegen_flags: <defaults>
</compile_context>

<pallas_src>
import math
import functools

import jax
import jax.numpy as jnp
from jax.experimental import pallas as pl
from jax.experimental.pallas import tpu as pltpu


# ----------------------------- kernels --------------------------------------

def _pe_add_kernel(x_ref, pe_ref, o_ref):
    # x_ref: (tS, B, D), pe_ref: (tS, 1, D) -> broadcast-add over batch.
    o_ref[...] = (x_ref[...] + pe_ref[...]).astype(o_ref.dtype)


def _pe_add_dropout_kernel(dropout_p, x_ref, pe_ref, bits_ref, o_ref):
    # Training-mode forward: (x + pe) then inverted dropout (zero w.p. p,
    # scale survivors by 1/(1-p)). Bernoulli draw is done in-kernel by
    # thresholding pre-generated uint32 random bits.
    y = x_ref[...] + pe_ref[...]
    thresh = jnp.uint32(min(int(round(dropout_p * 4294967296.0)), 4294967295))
    keep = bits_ref[...] >= thresh                     # P(keep) = 1 - p
    scale = 1.0 / (1.0 - dropout_p)                    # weak-typed: stays in y.dtype
    o_ref[...] = jnp.where(keep, y * scale, jnp.zeros_like(y)).astype(o_ref.dtype)


# ----------------------------- wrapper ---------------------------------------

def make_positional_encoding_table(max_len, d_model, dtype=jnp.float32):
    """Builds pe of shape (max_len, d_model), matching the PyTorch __init__."""
    position = jnp.arange(max_len, dtype=jnp.float32)[:, None]            # (L, 1)
    div_term = jnp.exp(
        jnp.arange(0, d_model, 2, dtype=jnp.float32) * (-math.log(10000.0) / d_model)
    )                                                                     # (D/2,)
    angles = position * div_term                                          # (L, D/2)
    pe = jnp.zeros((max_len, d_model), dtype)
    pe = pe.at[:, 0::2].set(jnp.sin(angles).astype(dtype))
    pe = pe.at[:, 1::2].set(jnp.cos(angles).astype(dtype))
    return pe


def _choose_row_block(S, B, D, itemsize, target_bytes=2 << 20):
    """Rows of the seq axis per block so one x block is ~target_bytes (<= ~2 MiB).

    Keeps 2 inputs x 2 buffers + 2 output buffers comfortably inside the
    default scoped VMEM on v5e/v6e/v7x. The last two block dims (B, D) are kept
    at full extent, which always satisfies the (8, 128) tiling rule.
    """
    rows = max(1, target_bytes // max(1, B * D * itemsize))
    return int(min(S, rows))


def positional_encoding(x, pe, *, dropout_p=0.1, train=False, rng_key=None,
                        block_rows=None):
    """Forward pass of PositionalEncoding.

    x:  (S, B, D)  seq-first activations
    pe: (max_len, D) precomputed sinusoidal table
    """
    S, B, D = x.shape
    pe_s = pe[:S].astype(x.dtype)[:, None, :]          # (S, 1, D) == self.pe[:x.size(0), :]

    ts = block_rows if block_rows is not None else _choose_row_block(
        S, B, D, jnp.dtype(x.dtype).itemsize)
    grid = (pl.cdiv(S, ts),)

    x_spec = pl.BlockSpec((ts, B, D), lambda i: (i, 0, 0))
    pe_spec = pl.BlockSpec((ts, 1, D), lambda i: (i, 0, 0))
    cparams = pltpu.CompilerParams(dimension_semantics=("parallel",))

    if (not train) or dropout_p == 0.0:
        # Eval-mode dropout is identity.
        return pl.pallas_call(
            _pe_add_kernel,
            out_shape=jax.ShapeDtypeStruct((S, B, D), x.dtype),
            grid=grid,
            in_specs=[x_spec, pe_spec],
            out_specs=x_spec,
            compiler_params=cparams,
            input_output_aliases={0: 0},
        )(x, pe_s)

    if rng_key is None:
        rng_key = jax.random.PRNGKey(0)
    # TODO(synk): PyTorch's CPU/CUDA dropout RNG stream cannot be reproduced
    # bit-exactly; we draw independent uniform uint32 bits with jax.random.
    bits = jax.random.bits(rng_key, (S, B, D), dtype=jnp.uint32)
    bits_spec = pl.BlockSpec((ts, B, D), lambda i: (i, 0, 0))

    return pl.pallas_call(
        functools.partial(_pe_add_dropout_kernel, float(dropout_p)),
        out_shape=jax.ShapeDtypeStruct((S, B, D), x.dtype),
        grid=grid,
        in_specs=[x_spec, pe_spec, bits_spec],
        out_specs=x_spec,
        compiler_params=cparams,
        input_output_aliases={0: 0},
    )(x, pe_s, bits)


# ----------------------------- main -------------------------------------------

if __name__ == "__main__":
    key = jax.random.PRNGKey(0)
    k_x, k_drop = jax.random.split(key)

    S, B, D = 8, 2, 32          # seq_len, batch, d_model
    MAX_LEN = 3000              # matches module default
    P = 0.1

    x = jax.random.normal(k_x, (S, B, D), dtype=jnp.float32)
    pe = make_positional_encoding_table(MAX_LEN, D)
    ref = x + pe[:S][:, None, :]

    # Eval-mode forward (deterministic): check exactly against reference.
    out_eval = positional_encoding(x, pe, dropout_p=P, train=False)
    jax.block_until_ready(out_eval)
    assert out_eval.shape == (S, B, D)
    assert jnp.allclose(out_eval, ref, atol=1e-6), "eval-mode mismatch"

    # Training-mode forward (stochastic dropout): every element is either 0
    # (dropped) or (x+pe)/(1-p) (kept & rescaled).
    out_train = positional_encoding(x, pe, dropout_p=P, train=True, rng_key=k_drop)
    jax.block_until_ready(out_train)
    assert out_train.shape == (S, B, D)
    kept_val = ref / (1.0 - P)
    ok = jnp.isclose(out_train, 0.0, atol=1e-6) | jnp.isclose(out_train, kept_val, atol=1e-5)
    assert bool(jnp.all(ok)), "train-mode dropout values inconsistent"

    print("KERNEL_OK")
</pallas_src>

<mosaic_0001>
module attributes {stable_mosaic.version = 11 : i64} {
  func.func @_pe_add_kernel(%arg0: i32, %arg1: memref<8x2x32xf32, #tpu.memory_space<vmem>>, %arg2: memref<8x1x32xf32, #tpu.memory_space<vmem>>, %arg3: memref<8x2x32xf32, #tpu.memory_space<vmem>>) attributes {dimension_semantics = [#tpu.dimension_semantics<parallel>], iteration_bounds = array<i64: 1>, scalar_prefetch = 0 : i64, scratch_operands = 0 : i64, tpu.core_type = #tpu.core_type<tc>, window_params = [{transform_indices = @transform_0, window_bounds = array<i64: 8, 2, 32>}, {transform_indices = @transform_1, window_bounds = array<i64: 8, 1, 32>}, {transform_indices = @transform_2, window_bounds = array<i64: 8, 2, 32>}]} {
    %c0 = arith.constant 0 : index
    %c0_0 = arith.constant 0 : index
    %c0_1 = arith.constant 0 : index
    %0 = vector.load %arg1[%c0, %c0_0, %c0_1] : memref<8x2x32xf32, #tpu.memory_space<vmem>>, vector<8x2x32xf32>
    %c0_2 = arith.constant 0 : index
    %c0_3 = arith.constant 0 : index
    %c0_4 = arith.constant 0 : index
    %1 = vector.load %arg2[%c0_2, %c0_3, %c0_4] : memref<8x1x32xf32, #tpu.memory_space<vmem>>, vector<8x1x32xf32>
    %2 = vector.broadcast %1 : vector<8x1x32xf32> to vector<8x2x32xf32>
    %3 = arith.addf %0, %2 : vector<8x2x32xf32>
    %c0_5 = arith.constant 0 : index
    %c0_6 = arith.constant 0 : index
    %c0_7 = arith.constant 0 : index
    %4 = vector.load %arg3[%c0_5, %c0_6, %c0_7] : memref<8x2x32xf32, #tpu.memory_space<vmem>>, vector<8x2x32xf32>
    tpu.vector_store %arg3[%c0_5, %c0_6, %c0_7], %3 {strides = array<i32>} : memref<8x2x32xf32, #tpu.memory_space<vmem>>, vector<8x2x32xf32>,
    return
  }
  func.func @transform_0(%arg0: i32) -> (i32, i32, i32) {
    %c0_i32 = arith.constant 0 : i32
    %c0_i32_0 = arith.constant 0 : i32
    %c0_i32_1 = arith.constant 0 : i32
    return %arg0, %c0_i32, %c0_i32_0 : i32, i32, i32
  }
  func.func @transform_1(%arg0: i32) -> (i32, i32, i32) {
    %c0_i32 = arith.constant 0 : i32
    %c0_i32_0 = arith.constant 0 : i32
    %c0_i32_1 = arith.constant 0 : i32
    return %arg0, %c0_i32, %c0_i32_0 : i32, i32, i32
  }
  func.func @transform_2(%arg0: i32) -> (i32, i32, i32) {
    %c0_i32 = arith.constant 0 : i32
    %c0_i32_0 = arith.constant 0 : i32
    %c0_i32_1 = arith.constant 0 : i32
    return %arg0, %c0_i32, %c0_i32_0 : i32, i32, i32
  }
}

</mosaic_0001>

<llo_original>
// kernel: tpu_custom_call.1
$region0: #{tpu_custom_call.1}
  #allocation0 [shape = 'u32[]', space=smem, size = 0x4, offset = 0x4, fixed_abs, tag = 'smem constant byte address 0x4 - core index']
  #allocation1 [shape = 'u32[72,128]{1,0:T(1,128)}', space=vmem, size = 0x9000, scoped, tag = 'internal scratch']
  %s0 = inlined_call_operand.hbm [shape: f32[8,2,32], index: 0, kind: input, shape index: {}, may-alias: {0,2}]
  %s1 = inlined_call_operand.vmem [shape: f32[8,1,32], index: 1, kind: input, shape index: {}]
  %s2 = inlined_call_operand.hbm [shape: f32[8,2,32], index: 2, kind: output, shape index: {}, may-alias: {0,2}]
  %s3 = sld [smem:[#allocation0]]
  $region22: #{tpu_custom_call.1} parent=0
    _
  %s5 = ssub.s32 1, %s3
  %s6 = scalar_select 0, %s5, %s3
  $region1: #{tpu_custom_call.1} parent=0
    #allocation2 [shape = 'u8[8192]{0}', space=vmem, size = 0x2000, scoped, tag = 'input window, operand 0, single buffered']
    #allocation3 [shape = 's32[1]{0}', space=sflag, size = 0x4, scoped, tag = 'scoped memory for tpu_custom_call.1']
    #allocation4 [shape = 's32[1]{0}', space=sflag, size = 0x4, scoped, tag = 'scoped memory for tpu_custom_call.1']
    #allocation5 [shape = 'u8[8192]{0}', space=vmem, size = 0x2000, scoped, tag = 'output window, operand 0, single buffered']
    %7 = vsyncpa [#allocation3], 0
    %8 = vsyncpa [#allocation4], 0
    // Predicated region
    $region2: #{tpu_custom_call.1} parent=1 // pred_check
      _
    $region3: #{tpu_custom_call.1} parent=1 // pred_check_branch
      %10 = sbr.rel (0) target = $region5
    $region4: #{tpu_custom_call.1} parent=1 // pred_region
      %12 = vsyncadd [#allocation3], 0
      %s13 = sshll.u32 %s0, 4
      %s14 = int_to_ptr.hbm [resolvable:$true] %s13
      %s15 = sshll.u32 [#allocation2], 4
      %s16 = int_to_ptr.vmem [resolvable:$true] %s15
      %21 = dma.hbm_to_vmem [thread:$0]  %s14, 256, %s16, [#allocation3], 32, 32, 2
    $region5: #{tpu_custom_call.1} parent=1 // pred_fallthru
      _
    // Predicated region
    $region6: #{tpu_custom_call.1} parent=1 // pred_check
      _
    $region7: #{tpu_custom_call.1} parent=1 // pred_check_branch
      %23 = sbr.rel (0) target = $region9
    $region8: #{tpu_custom_call.1} parent=1 // pred_region
      _
    $region9: #{tpu_custom_call.1} parent=1 // pred_fallthru
      _
    // Predicated region
    $region10: #{tpu_custom_call.1} parent=1 // pred_check
      _
    $region11: #{tpu_custom_call.1} parent=1 // pred_check_branch
      %25 = sbr.rel (0) target = $region13
    $region12: #{tpu_custom_call.1} parent=1 // pred_region
      %27 = dma.done [#allocation3], 256
    $region13: #{tpu_custom_call.1} parent=1 // pred_fallthru
      _
    %v28 = vld [vmem:[#allocation2] sm:$0x3]
    %v29 = vld [vmem:[#allocation2 + $0x2] sm:$0x3]
    %v30 = vld [vmem:[#allocation2 + $0x4] sm:$0x3]
    %v31 = vld [vmem:[#allocation2 + $0x6] sm:$0x3]
    %v32 = vld [vmem:[#allocation2 + $0x8] sm:$0x3]
    %v33 = vld [vmem:[#allocation2 + $0xa] sm:$0x3]
    %v34 = vld [vmem:[#allocation2 + $0xc] sm:$0x3]
    %v35 = vld [vmem:[#allocation2 + $0xe] sm:$0x3]
    %v36 = vld [vmem:[%s1] sm:$0x1]
    %v37 = vld [vmem:[%s1 + $0x1] sm:$0x1]
    %v38 = vld [vmem:[%s1 + $0x2] sm:$0x1]
    %v39 = vld [vmem:[%s1 + $0x3] sm:$0x1]
    %v40 = vld [vmem:[%s1 + $0x4] sm:$0x1]
    %v41 = vld [vmem:[%s1 + $0x5] sm:$0x1]
    %v42 = vld [vmem:[%s1 + $0x6] sm:$0x1]
    %v43 = vld [vmem:[%s1 + $0x7] sm:$0x1]
    %v52 = vperm.slane %v36, 0
    %v53 = vperm.slane %v37, 0
    %v54 = vperm.slane %v38, 0
    %v55 = vperm.slane %v39, 0
    %v56 = vperm.slane %v40, 0
    %v57 = vperm.slane %v41, 0
    %v58 = vperm.slane %v42, 0
    %v59 = vperm.slane %v43, 0
    %v68 = vadd.f32 %v28, %v52
    %v69 = vadd.f32 %v29, %v53
    %v70 = vadd.f32 %v30, %v54
    %v71 = vadd.f32 %v31, %v55
    %v72 = vadd.f32 %v32, %v56
    %v73 = vadd.f32 %v33, %v57
    %v74 = vadd.f32 %v34, %v58
    %v75 = vadd.f32 %v35, %v59
    %vm76 = vcmask 254976
    %77 = vst.msk [vmem:[#allocation5] sm:$0x3] %vm76, %v68
    %78 = vst.msk [vmem:[#allocation5 + $0x2] sm:$0x3] %vm76, %v69
    %79 = vst.msk [vmem:[#allocation5 + $0x4] sm:$0x3] %vm76, %v70
    %80 = vst.msk [vmem:[#allocation5 + $0x6] sm:$0x3] %vm76, %v71
    %81 = vst.msk [vmem:[#allocation5 + $0x8] sm:$0x3] %vm76, %v72
    %82 = vst.msk [vmem:[#allocation5 + $0xa] sm:$0x3] %vm76, %v73
    %83 = vst.msk [vmem:[#allocation5 + $0xc] sm:$0x3] %vm76, %v74
    %84 = vst.msk [vmem:[#allocation5 + $0xe] sm:$0x3] %vm76, %v75
    // Predicated region
    $region14: #{tpu_custom_call.1} parent=1 // pred_check
      _
    $region15: #{tpu_custom_call.1} parent=1 // pred_check_branch
      %86 = sbr.rel (0) target = $region17
    $region16: #{tpu_custom_call.1} parent=1 // pred_region
      %88 = vsyncadd [#allocation4], 0
      %s89 = sshll.u32 [#allocation5], 4
      %s90 = int_to_ptr.vmem [resolvable:$true] %s89
      %s91 = sshll.u32 %s2, 4
      %s92 = int_to_ptr.hbm [resolvable:$true] %s91
      %97 = dma.vmem_to_hbm [thread:$0]  %s90, 256, %s92, [#allocation4], 32, 32, 2
    $region17: #{tpu_custom_call.1} parent=1 // pred_fallthru
      _
    // Predicated region
    $region18: #{tpu_custom_call.1} parent=1 // pred_check
      _
    $region19: #{tpu_custom_call.1} parent=1 // pred_check_branch
      %99 = sbr.rel (0) target = $region21
    $region20: #{tpu_custom_call.1} parent=1 // pred_region
      %101 = dma.done [#allocation4], 256
    $region21: #{tpu_custom_call.1} parent=1 // pred_fallthru
      _
    %102 = vsyncpa [#allocation3], 1
    %103 = vsyncpa [#allocation4], 1

</llo_original>
